<compile_context>
chip_gen: v6e
topology: v6e:2x2x1
jax: 0.10.0
libtpu: 0.0.40
codegen_flags: <defaults>
</compile_context>

<pallas_src>
import functools

import jax
import jax.numpy as jnp
from jax import lax
from jax.experimental import pallas as pl
from jax.experimental.pallas import tpu as pltpu

_LANES = 128
_SUBLANES = 8
_CHUNK_ROWS = 512      # rows per in-kernel compute chunk (256 KiB of f32/vreg work)


def _default_tm_max():
    """Generation-tuned feature-tile height (rows of 128 lanes per grid step)."""
    try:
        kind = jax.devices()[0].device_kind.lower()
    except Exception:
        return 2048
    if "v7" in kind:
        return 8192    # ~4 MiB f32 per input per step (3.2 TB/s HBM -> overhead ~12%)
    if "v6" in kind:
        return 4096    # ~2 MiB per input per step (1.4 TB/s HBM)
    return 2048        # v5e and older / unknown


def _dice_partial_kernel(logit_ref, truth_ref, out_ref,
                         inter_acc, pp_acc, tt_acc,
                         *, w0, w1, clip_truth, chunk):
    """Accumulates per-(batch, split) partial sums over feature tiles.

    logit_ref / truth_ref : (1, tm, 128) VMEM tiles of one batch row.
    out_ref               : (1, 1, 3, 128) lane-wide partial sums
                            [sum(p*t), sum(p*p), sum(t*t)].
    *_acc                 : (8, 128) f32 accumulators (tiny, tile-size independent).
    """
    k = pl.program_id(2)

    @pl.when(k == 0)
    def _():
        inter_acc[...] = jnp.zeros_like(inter_acc)
        pp_acc[...] = jnp.zeros_like(pp_acc)
        tt_acc[...] = jnp.zeros_like(tt_acc)

    tm = logit_ref.shape[1]

    def accumulate(row0, nrows):
        logit = logit_ref[0, pl.ds(row0, nrows), :].astype(jnp.float32)
        truth = truth_ref[0, pl.ds(row0, nrows), :].astype(jnp.float32)
        if clip_truth:
            truth = jnp.clip(truth, 0.0, 1.0)

        # w = truth * (weights[1] - weights[0]) + weights[0]
        w = truth * (w1 - w0) + w0
        p = w * logit
        t = w * truth

        g = nrows // _SUBLANES

        def red(x):
            # (nrows,128) -> (g,8,128) -> sum over g: pure vreg adds (VPU only).
            if g == 1:
                return x
            return jnp.sum(x.reshape(g, _SUBLANES, _LANES), axis=0)

        inter_acc[...] += red(p * t)
        pp_acc[...] += red(p * p)
        tt_acc[...] += red(t * t)

    n_full = tm // chunk
    tail = tm - n_full * chunk
    if n_full == 1:
        accumulate(0, chunk)
    elif n_full > 1:
        def body(c, carry):
            accumulate(pl.multiple_of(c * chunk, chunk), chunk)
            return carry
        lax.fori_loop(0, n_full, body, 0, unroll=True)
    if tail > 0:
        accumulate(n_full * chunk, tail)

    @pl.when(k == pl.num_programs(2) - 1)
    def _():
        # Direct sublane-row stores; keep the 128-wide lane-dense output.
        out_ref[0, 0, 0:1, :] = jnp.sum(inter_acc[...], axis=0, keepdims=True)
        out_ref[0, 0, 1:2, :] = jnp.sum(pp_acc[...], axis=0, keepdims=True)
        out_ref[0, 0, 2:3, :] = jnp.sum(tt_acc[...], axis=0, keepdims=True)


def weighted_dice_loss(logit, truth, weights=(0.5, 0.5), smooth=1e-5,
                       *, assume_binary_truth=False, _tm_max=None):
    """Pallas implementation of WeightedDiceLoss.forward (n_labels == 1)."""
    B = logit.shape[0]
    logit2 = logit.reshape(B, -1)
    truth2 = truth.reshape(B, -1)   # kept in native dtype; cast happens per tile in-kernel
    assert logit2.shape == truth2.shape
    N = logit2.shape[1]

    tm_max = _tm_max if _tm_max is not None else _default_tm_max()

    # --- Tile / grid selection ------------------------------------------------
    rows = -(-N // _LANES)                         # ceil(N / 128)
    rows = -(-rows // _SUBLANES) * _SUBLANES       # round up to multiple of 8

    # Megacore: batch is the only truly parallel axis; when B is odd (e.g. 1),
    # split the reduction over a leading size-2 parallel axis so a 2-TC chip
    # (v7x) can shard it.  Free-ish on single-TC chips.
    splits = 2 if (B % 2 == 1 and rows >= 2 * _SUBLANES) else 1

    rows_per_split = -(-rows // splits)
    rows_per_split = -(-rows_per_split // _SUBLANES) * _SUBLANES
    kt = -(-rows_per_split // tm_max)
    tm = -(-rows_per_split // kt)
    tm = -(-tm // _SUBLANES) * _SUBLANES           # balanced: overshoot <= splits*kt*8 rows
    rows_pad = splits * kt * tm
    n_pad = rows_pad * _LANES

    # Zero padding contributes exactly 0 to all three sums (p = w*0, t = w*0).
    # Skip the pad copy entirely when already aligned.
    # TODO(synk): replace the residual jnp.pad with in-kernel tail masking
    # (scalar-prefetched true row count + broadcasted_iota) to avoid the copy.
    if n_pad != N:
        pad = ((0, 0), (0, n_pad - N))
        logit2 = jnp.pad(logit2, pad)
        truth2 = jnp.pad(truth2, pad)
    logit3 = logit2.reshape(B, rows_pad, _LANES)
    truth3 = truth2.reshape(B, rows_pad, _LANES)

    chunk = min(tm, _CHUNK_ROWS)

    kernel = functools.partial(
        _dice_partial_kernel,
        w0=float(weights[0]), w1=float(weights[1]),
        clip_truth=not assume_binary_truth, chunk=chunk)

    # VMEM budget: 2 inputs x 2 pipeline buffers x tile + tiny (8,128) scratch
    # + bounded per-chunk temporaries + headroom.  Well under every chip's
    # scoped budget even with the large v7x tile.
    in_block_bytes = tm * _LANES * (logit3.dtype.itemsize + truth3.dtype.itemsize)
    scratch_bytes = 3 * _SUBLANES * _LANES * 4
    tmp_bytes = 10 * chunk * _LANES * 4
    vmem_limit = int(min(max(2 * in_block_bytes + scratch_bytes + tmp_bytes + (2 << 20),
                             16 << 20),
                         30 << 20))

    partials = pl.pallas_call(
        kernel,
        out_shape=jax.ShapeDtypeStruct((B, splits, 3, _LANES), jnp.float32),
        grid_spec=pltpu.PrefetchScalarGridSpec(
            num_scalar_prefetch=0,
            grid=(B, splits, kt),
            in_specs=[
                pl.BlockSpec((1, tm, _LANES),
                             lambda b, s, k, kt=kt: (b, s * kt + k, 0)),
                pl.BlockSpec((1, tm, _LANES),
                             lambda b, s, k, kt=kt: (b, s * kt + k, 0)),
            ],
            out_specs=pl.BlockSpec((1, 1, 3, _LANES), lambda b, s, k: (b, s, 0, 0)),
            scratch_shapes=[
                pltpu.VMEM((_SUBLANES, _LANES), jnp.float32),  # sum(p*t) partials
                pltpu.VMEM((_SUBLANES, _LANES), jnp.float32),  # sum(p*p) partials
                pltpu.VMEM((_SUBLANES, _LANES), jnp.float32),  # sum(t*t) partials
            ],
        ),
        compiler_params=pltpu.CompilerParams(
            # Batch and core-split axes parallel (megacore sharding), feature
            # axis is the reduction -> arbitrary, last in grid.
            dimension_semantics=("parallel", "parallel", "arbitrary"),
            vmem_limit_bytes=vmem_limit),
    )(logit3, truth3)

    # Final tiny reductions + dice in plain JAX (B x S x 3 x 128 elements).
    sums = jnp.sum(partials, axis=(1, 3))           # (B, 3)
    inter, pp, tt = sums[:, 0], sums[:, 1], sums[:, 2]
    dice = 1.0 - (2.0 * inter + smooth) / (pp + tt + smooth)
    return jnp.mean(dice)


def _reference(logit, truth, weights=(0.5, 0.5), smooth=1e-5):
    B = logit.shape[0]
    p0 = logit.reshape(B, -1).astype(jnp.float32)
    t0 = jnp.clip(truth.reshape(B, -1).astype(jnp.float32), 0.0, 1.0)
    w = t0 * (weights[1] - weights[0]) + weights[0]
    p = w * p0
    t = w * t0
    inter = jnp.sum(p * t, axis=-1)
    union = jnp.sum(p * p, axis=-1) + jnp.sum(t * t, axis=-1)
    dice = 1.0 - (2.0 * inter + smooth) / (union + smooth)
    return jnp.mean(dice)


if __name__ == "__main__":
    # Module "parameters" (deterministic, from __init__ defaults).
    weights = (0.5, 0.5)
    smooth = 1e-5

    key = jax.random.PRNGKey(0)

    # 1) n_labels == 1 -> single-channel segmentation map, NCHW (small, aligned).
    k1, k2 = jax.random.split(key)
    B, C, H, W = 2, 1, 32, 32
    logit = jax.nn.sigmoid(jax.random.normal(k1, (B, C, H, W), jnp.float32))
    truth = (jax.random.uniform(k2, (B, C, H, W), jnp.float32) > 0.5
             ).astype(jnp.float32)
    loss = jax.block_until_ready(
        weighted_dice_loss(logit, truth, weights=weights, smooth=smooth))
    ref = _reference(logit, truth, weights=weights, smooth=smooth)
    assert jnp.allclose(loss, ref, rtol=1e-5, atol=1e-6), (loss, ref)

    # 1b) Binary-mask fast path (skips the in-kernel clip).
    loss_b = jax.block_until_ready(
        weighted_dice_loss(logit, truth, weights=weights, smooth=smooth,
                           assume_binary_truth=True))
    assert jnp.allclose(loss_b, ref, rtol=1e-5, atol=1e-6), (loss_b, ref)

    # 2) Non-lane-aligned spatial size -> exercises the zero-padding path.
    k3, k4 = jax.random.split(k2)
    logit_u = jax.nn.sigmoid(jax.random.normal(k3, (2, 1, 30, 30), jnp.float32))
    truth_u = (jax.random.uniform(k4, (2, 1, 30, 30), jnp.float32) > 0.5
               ).astype(jnp.float32)
    loss_u = jax.block_until_ready(
        weighted_dice_loss(logit_u, truth_u, weights=weights, smooth=smooth))
    ref_u = _reference(logit_u, truth_u, weights=weights, smooth=smooth)
    assert jnp.allclose(loss_u, ref_u, rtol=1e-5, atol=1e-6), (loss_u, ref_u)

    # 3) Force a multi-step reduction grid (kt > 1) with a tiny tile cap to
    #    exercise the accumulator init/finalize path cheaply.
    k5, k6 = jax.random.split(k4)
    logit_m = jax.nn.sigmoid(jax.random.normal(k5, (2, 1, 64, 64), jnp.float32))
    truth_m = (jax.random.uniform(k6, (2, 1, 64, 64), jnp.float32) > 0.5
               ).astype(jnp.float32)
    loss_m = jax.block_until_ready(
        weighted_dice_loss(logit_m, truth_m, weights=weights, smooth=smooth,
                           _tm_max=8))
    ref_m = _reference(logit_m, truth_m, weights=weights, smooth=smooth)
    assert jnp.allclose(loss_m, ref_m, rtol=1e-5, atol=1e-6), (loss_m, ref_m)

    # 4) Odd batch (B == 1) -> exercises the size-2 core-split reduction path.
    k7, k8 = jax.random.split(k6)
    logit_s = jax.nn.sigmoid(jax.random.normal(k7, (1, 1, 64, 64), jnp.float32))
    truth_s = (jax.random.uniform(k8, (1, 1, 64, 64), jnp.float32) > 0.5
               ).astype(jnp.float32)
    loss_s = jax.block_until_ready(
        weighted_dice_loss(logit_s, truth_s, weights=weights, smooth=smooth))
    ref_s = _reference(logit_s, truth_s, weights=weights, smooth=smooth)
    assert jnp.allclose(loss_s, ref_s, rtol=1e-5, atol=1e-6), (loss_s, ref_s)

    # 5) Larger feature count -> exercises the in-kernel chunked (fori) loop.
    k9, k10 = jax.random.split(k8)
    logit_l = jax.nn.sigmoid(jax.random.normal(k9, (2, 1, 256, 512), jnp.float32))
    truth_l = (jax.random.uniform(k10, (2, 1, 256, 512), jnp.float32) > 0.5
               ).astype(jnp.float32)
    loss_l = jax.block_until_ready(
        weighted_dice_loss(logit_l, truth_l, weights=weights, smooth=smooth))
    ref_l = _reference(logit_l, truth_l, weights=weights, smooth=smooth)
    assert jnp.allclose(loss_l, ref_l, rtol=1e-5, atol=1e-6), (loss_l, ref_l)

    print("KERNEL_OK")
</pallas_src>

<mosaic_0001>
module attributes {stable_mosaic.version = 11 : i64} {
  func.func @_dice_partial_kernel(%arg0: i32, %arg1: i32, %arg2: i32, %arg3: memref<1x8x128xf32, #tpu.memory_space<vmem>>, %arg4: memref<1x8x128xf32, #tpu.memory_space<vmem>>, %arg5: memref<1x1x3x128xf32, #tpu.memory_space<vmem>>, %arg6: memref<8x128xf32, #tpu.memory_space<vmem>>, %arg7: memref<8x128xf32, #tpu.memory_space<vmem>>, %arg8: memref<8x128xf32, #tpu.memory_space<vmem>>) attributes {dimension_semantics = [#tpu.dimension_semantics<parallel>, #tpu.dimension_semantics<parallel>, #tpu.dimension_semantics<arbitrary>], iteration_bounds = array<i64: 2, 1, 1>, scalar_prefetch = 0 : i64, scratch_operands = 3 : i64, tpu.core_type = #tpu.core_type<tc>, window_params = [{transform_indices = @transform_0, window_bounds = array<i64: 1, 8, 128>}, {transform_indices = @transform_1, window_bounds = array<i64: 1, 8, 128>}, {transform_indices = @transform_2, window_bounds = array<i64: 1, 1, 3, 128>}]} {
    %c0_i32 = arith.constant 0 : i32
    %0 = arith.cmpi eq, %arg2, %c0_i32 : i32
    %1 = arith.extui %0 : i1 to i32
    %c0_i32_0 = arith.constant 0 : i32
    %2 = arith.cmpi ne, %1, %c0_i32_0 : i32
    scf.if %2 {
      %cst_23 = arith.constant 0.000000e+00 : f32
      %32 = vector.broadcast %cst_23 : f32 to vector<8x128xf32>
      %c0_24 = arith.constant 0 : index
      %c0_25 = arith.constant 0 : index
      %33 = vector.load %arg6[%c0_24, %c0_25] : memref<8x128xf32, #tpu.memory_space<vmem>>, vector<8x128xf32>
      tpu.vector_store %arg6[%c0_24, %c0_25], %32 {strides = array<i32>} : memref<8x128xf32, #tpu.memory_space<vmem>>, vector<8x128xf32>,
      %cst_26 = arith.constant 0.000000e+00 : f32
      %34 = vector.broadcast %cst_26 : f32 to vector<8x128xf32>
      %c0_27 = arith.constant 0 : index
      %c0_28 = arith.constant 0 : index
      %35 = vector.load %arg7[%c0_27, %c0_28] : memref<8x128xf32, #tpu.memory_space<vmem>>, vector<8x128xf32>
      tpu.vector_store %arg7[%c0_27, %c0_28], %34 {strides = array<i32>} : memref<8x128xf32, #tpu.memory_space<vmem>>, vector<8x128xf32>,
      %cst_29 = arith.constant 0.000000e+00 : f32
      %36 = vector.broadcast %cst_29 : f32 to vector<8x128xf32>
      %c0_30 = arith.constant 0 : index
      %c0_31 = arith.constant 0 : index
      %37 = vector.load %arg8[%c0_30, %c0_31] : memref<8x128xf32, #tpu.memory_space<vmem>>, vector<8x128xf32>
      tpu.vector_store %arg8[%c0_30, %c0_31], %36 {strides = array<i32>} : memref<8x128xf32, #tpu.memory_space<vmem>>, vector<8x128xf32>,
    } else {
    }
    %c0 = arith.constant 0 : index
    %c0_1 = arith.constant 0 : index
    %c0_2 = arith.constant 0 : index
    %3 = vector.load %arg3[%c0, %c0_1, %c0_2] : memref<1x8x128xf32, #tpu.memory_space<vmem>>, vector<1x8x128xf32>
    %4 = vector.shape_cast %3 : vector<1x8x128xf32> to vector<8x128xf32>
    %c0_3 = arith.constant 0 : index
    %c0_4 = arith.constant 0 : index
    %c0_5 = arith.constant 0 : index
    %5 = vector.load %arg4[%c0_3, %c0_4, %c0_5] : memref<1x8x128xf32, #tpu.memory_space<vmem>>, vector<1x8x128xf32>
    %6 = vector.shape_cast %5 : vector<1x8x128xf32> to vector<8x128xf32>
    %cst = arith.constant 0.000000e+00 : f32
    %cst_6 = arith.constant 1.000000e+00 : f32
    %7 = vector.broadcast %cst : f32 to vector<8x128xf32>
    %8 = arith.maximumf %7, %6 : vector<8x128xf32>
    %9 = vector.broadcast %cst_6 : f32 to vector<8x128xf32>
    %10 = arith.minimumf %9, %8 : vector<8x128xf32>
    %cst_7 = arith.constant 0.000000e+00 : f32
    %11 = vector.broadcast %cst_7 : f32 to vector<8x128xf32>
    %12 = arith.mulf %10, %11 : vector<8x128xf32>
    %cst_8 = arith.constant 5.000000e-01 : f32
    %13 = vector.broadcast %cst_8 : f32 to vector<8x128xf32>
    %14 = arith.addf %12, %13 : vector<8x128xf32>
    %15 = arith.mulf %14, %4 : vector<8x128xf32>
    %16 = arith.mulf %14, %10 : vector<8x128xf32>
    %c0_9 = arith.constant 0 : index
    %c0_10 = arith.constant 0 : index
    %17 = vector.load %arg6[%c0_9, %c0_10] : memref<8x128xf32, #tpu.memory_space<vmem>>, vector<8x128xf32>
    %18 = arith.mulf %15, %16 : vector<8x128xf32>
    %19 = arith.addf %17, %18 : vector<8x128xf32>
    %c0_11 = arith.constant 0 : index
    %c0_12 = arith.constant 0 : index
    %20 = vector.load %arg6[%c0_11, %c0_12] : memref<8x128xf32, #tpu.memory_space<vmem>>, vector<8x128xf32>
    tpu.vector_store %arg6[%c0_11, %c0_12], %19 {strides = array<i32>} : memref<8x128xf32, #tpu.memory_space<vmem>>, vector<8x128xf32>,
    %c0_13 = arith.constant 0 : index
    %c0_14 = arith.constant 0 : index
    %21 = vector.load %arg7[%c0_13, %c0_14] : memref<8x128xf32, #tpu.memory_space<vmem>>, vector<8x128xf32>
    %22 = arith.mulf %15, %15 : vector<8x128xf32>
    %23 = arith.addf %21, %22 : vector<8x128xf32>
    %c0_15 = arith.constant 0 : index
    %c0_16 = arith.constant 0 : index
    %24 = vector.load %arg7[%c0_15, %c0_16] : memref<8x128xf32, #tpu.memory_space<vmem>>, vector<8x128xf32>
    tpu.vector_store %arg7[%c0_15, %c0_16], %23 {strides = array<i32>} : memref<8x128xf32, #tpu.memory_space<vmem>>, vector<8x128xf32>,
    %c0_17 = arith.constant 0 : index
    %c0_18 = arith.constant 0 : index
    %25 = vector.load %arg8[%c0_17, %c0_18] : memref<8x128xf32, #tpu.memory_space<vmem>>, vector<8x128xf32>
    %26 = arith.mulf %16, %16 : vector<8x128xf32>
    %27 = arith.addf %25, %26 : vector<8x128xf32>
    %c0_19 = arith.constant 0 : index
    %c0_20 = arith.constant 0 : index
    %28 = vector.load %arg8[%c0_19, %c0_20] : memref<8x128xf32, #tpu.memory_space<vmem>>, vector<8x128xf32>
    tpu.vector_store %arg8[%c0_19, %c0_20], %27 {strides = array<i32>} : memref<8x128xf32, #tpu.memory_space<vmem>>, vector<8x128xf32>,
    %c0_i32_21 = arith.constant 0 : i32
    %29 = arith.cmpi eq, %arg2, %c0_i32_21 : i32
    %30 = arith.extui %29 : i1 to i32
    %c0_i32_22 = arith.constant 0 : i32
    %31 = arith.cmpi ne, %30, %c0_i32_22 : i32
    scf.if %31 {
      %c0_23 = arith.constant 0 : index
      %c0_24 = arith.constant 0 : index
      %32 = vector.load %arg6[%c0_23, %c0_24] : memref<8x128xf32, #tpu.memory_space<vmem>>, vector<8x128xf32>
      %cst_25 = arith.constant dense<0.000000e+00> : vector<128xf32>
      %33 = vector.multi_reduction <add>, %32, %cst_25 [0] : vector<8x128xf32> to vector<128xf32>
      %34 = vector.shape_cast %33 : vector<128xf32> to vector<1x128xf32>
      %c0_26 = arith.constant 0 : index
      %c0_27 = arith.constant 0 : index
      %c0_28 = arith.constant 0 : index
      %c0_29 = arith.constant 0 : index
      %35 = vector.load %arg5[%c0_26, %c0_27, %c0_28, %c0_29] : memref<1x1x3x128xf32, #tpu.memory_space<vmem>>, vector<1x1x1x128xf32>
      %36 = vector.shape_cast %35 : vector<1x1x1x128xf32> to vector<1x128xf32>
      %37 = vector.shape_cast %34 : vector<1x128xf32> to vector<1x1x1x128xf32>
      tpu.vector_store %arg5[%c0_26, %c0_27, %c0_28, %c0_29], %37 {strides = array<i32>} : memref<1x1x3x128xf32, #tpu.memory_space<vmem>>, vector<1x1x1x128xf32>,
      %c0_30 = arith.constant 0 : index
      %c0_31 = arith.constant 0 : index
      %38 = vector.load %arg7[%c0_30, %c0_31] : memref<8x128xf32, #tpu.memory_space<vmem>>, vector<8x128xf32>
      %cst_32 = arith.constant dense<0.000000e+00> : vector<128xf32>
      %39 = vector.multi_reduction <add>, %38, %cst_32 [0] : vector<8x128xf32> to vector<128xf32>
      %40 = vector.shape_cast %39 : vector<128xf32> to vector<1x128xf32>
      %c0_33 = arith.constant 0 : index
      %c0_34 = arith.constant 0 : index
      %c1 = arith.constant 1 : index
      %c0_35 = arith.constant 0 : index
      %41 = vector.load %arg5[%c0_33, %c0_34, %c1, %c0_35] : memref<1x1x3x128xf32, #tpu.memory_space<vmem>>, vector<1x1x1x128xf32>
      %42 = vector.shape_cast %41 : vector<1x1x1x128xf32> to vector<1x128xf32>
      %43 = vector.shape_cast %40 : vector<1x128xf32> to vector<1x1x1x128xf32>
      tpu.vector_store %arg5[%c0_33, %c0_34, %c1, %c0_35], %43 {strides = array<i32>} : memref<1x1x3x128xf32, #tpu.memory_space<vmem>>, vector<1x1x1x128xf32>,
      %c0_36 = arith.constant 0 : index
      %c0_37 = arith.constant 0 : index
      %44 = vector.load %arg8[%c0_36, %c0_37] : memref<8x128xf32, #tpu.memory_space<vmem>>, vector<8x128xf32>
      %cst_38 = arith.constant dense<0.000000e+00> : vector<128xf32>
      %45 = vector.multi_reduction <add>, %44, %cst_38 [0] : vector<8x128xf32> to vector<128xf32>
      %46 = vector.shape_cast %45 : vector<128xf32> to vector<1x128xf32>
      %c0_39 = arith.constant 0 : index
      %c0_40 = arith.constant 0 : index
      %c2 = arith.constant 2 : index
      %c0_41 = arith.constant 0 : index
      %47 = vector.load %arg5[%c0_39, %c0_40, %c2, %c0_41] : memref<1x1x3x128xf32, #tpu.memory_space<vmem>>, vector<1x1x1x128xf32>
      %48 = vector.shape_cast %47 : vector<1x1x1x128xf32> to vector<1x128xf32>
      %49 = vector.shape_cast %46 : vector<1x128xf32> to vector<1x1x1x128xf32>
      tpu.vector_store %arg5[%c0_39, %c0_40, %c2, %c0_41], %49 {strides = array<i32>} : memref<1x1x3x128xf32, #tpu.memory_space<vmem>>, vector<1x1x1x128xf32>,
    } else {
    }
    return
  }
  func.func @transform_0(%arg0: i32, %arg1: i32, %arg2: i32) -> (i32, i32, i32) {
    %c1_i32 = arith.constant 1 : i32
    %0 = arith.muli %arg1, %c1_i32 : i32
    %1 = arith.addi %0, %arg2 : i32
    %c0_i32 = arith.constant 0 : i32
    %c0_i32_0 = arith.constant 0 : i32
    return %arg0, %1, %c0_i32 : i32, i32, i32
  }
  func.func @transform_1(%arg0: i32, %arg1: i32, %arg2: i32) -> (i32, i32, i32) {
    %c1_i32 = arith.constant 1 : i32
    %0 = arith.muli %arg1, %c1_i32 : i32
    %1 = arith.addi %0, %arg2 : i32
    %c0_i32 = arith.constant 0 : i32
    %c0_i32_0 = arith.constant 0 : i32
    return %arg0, %1, %c0_i32 : i32, i32, i32
  }
  func.func @transform_2(%arg0: i32, %arg1: i32, %arg2: i32) -> (i32, i32, i32, i32) {
    %c0_i32 = arith.constant 0 : i32
    %c0_i32_0 = arith.constant 0 : i32
    %c0_i32_1 = arith.constant 0 : i32
    return %arg0, %arg1, %c0_i32, %c0_i32_0 : i32, i32, i32, i32
  }
}

</mosaic_0001>

<llo_original>
// kernel: tpu_custom_call.1
$region0: #{tpu_custom_call.1}
  #allocation0 [shape = 'u32[]', space=smem, size = 0x4, offset = 0x4, fixed_abs, tag = 'smem constant byte address 0x4 - core index']
  #allocation1 [shape = 'u32[144,128]{1,0:T(1,128)}', space=vmem, size = 0x12000, scoped, tag = 'internal scratch']
  #allocation2 [shape = 'f32[8,128]{1,0:T(8,128)}', space=vmem, size = 0x1000, scoped, tag = 'scratch operand']
  #allocation3 [shape = 'f32[8,128]{1,0:T(8,128)}', space=vmem, size = 0x1000, scoped, tag = 'scratch operand']
  #allocation4 [shape = 'f32[8,128]{1,0:T(8,128)}', space=vmem, size = 0x1000, scoped, tag = 'scratch operand']
  %s0 = inlined_call_operand.hbm [shape: f32[2,8,128], index: 0, kind: input, shape index: {}]
  %s1 = inlined_call_operand.hbm [shape: f32[2,8,128], index: 1, kind: input, shape index: {}]
  %s2 = inlined_call_operand.vmem [shape: f32[2,1,3,128], index: 2, kind: output, shape index: {}]
  %s3 = sld [smem:[#allocation0]]
  $region57: #{tpu_custom_call.1} parent=0
    _
  %s5 = ssub.s32 1, %s3
  %s6 = scalar_select 0, %s5, %s3
  $region1: #{tpu_custom_call.1} parent=0
    #allocation5 [shape = 'u8[8192]{0}', space=vmem, size = 0x2000, scoped, tag = 'input window, operand 0']
    #allocation6 [shape = 's32[2]{0}', space=sflag, size = 0x8, scoped, tag = 'scoped memory for tpu_custom_call.1']
    #allocation7 [shape = 'u8[8192]{0}', space=vmem, size = 0x2000, scoped, tag = 'input window, operand 1']
    #allocation8 [shape = 's32[2]{0}', space=sflag, size = 0x8, scoped, tag = 'scoped memory for tpu_custom_call.1']
    %7 = vsyncpa [#allocation6], 0
    %s8 = scalar_lea.sflag [#allocation6], 1
    %9 = vsyncpa %s8, 0
    %10 = vsyncpa [#allocation8], 0
    %s11 = scalar_lea.sflag [#allocation8], 1
    %12 = vsyncpa %s11, 0
    loop: start=0, step=1, limit=4
    $region2: #{tpu_custom_call.1} parent=1 // loop_pre_header
      _
    $region3: #{tpu_custom_call.1} parent=1 // loop_header
      %s14 = sphi 0, %s18
      %p15 = scmp.ge.s32.totalorder %s14, 4
      %s21 = sphi 0, %s40
      %s22 = sphi 0, %s36
      %s23 = sphi 0, %s32
      %s24 = sphi 0, %s21
      %s25 = sphi 0, %s22
      %s26 = sphi 0, %s23
      %s27 = sphi 0, %s24
      %s28 = sphi 0, %s25
      %s29 = sphi 0, %s26
      %s47 = sphi 0, %s49
      %s50 = sphi 0, %s47
      %s51 = sphi 0, %s50
      %s67 = sphi 0, %s51
      %s77 = sphi 0, %s79
      %s80 = sphi 0, %s77
      %s81 = sphi 0, %s80
      %s97 = sphi 0, %s81
      %s105 = sphi 0, %s107
      %s108 = sphi 0, %s105
      %s109 = sphi 0, %s108
      %s125 = sphi 0, %s109
    $region4: #{tpu_custom_call.1} parent=1 // loop_header_branch
      %17 = sbr.rel (%p15) target = $region8
    $region5: #{tpu_custom_call.1} parent=1 // loop_body
      %s19 = ssub.s32 %s14, 1
      %s20 = ssub.s32 %s14, 2
      %s30 = sadd.s32 1, %s23
      %p31 = scmp.ge.s32.totalorder %s30, 1
      %s32 = scalar_select %p31, 0, %s30
      %s33 = sadd.s32 1, %s22
      %s34 = scalar_select %p31, %s33, %s22
      %p35 = scmp.ge.s32.totalorder %s34, 1
      %s36 = scalar_select %p35, 0, %s34
      %s37 = sadd.s32 1, %s21
      %s38 = scalar_select %p35, %s37, %s21
      %p39 = scmp.ge.s32.totalorder %s38, 2
      %s40 = scalar_select %p39, 0, %s38
      %s41 = sadd.s32 %s22, %s23
      %s42 = sadd.s32 %s36, %s32
      %s43 = ssub.s32 %s21, %s40
      %s44 = ssub.s32 %s41, %s42
      %s45 = sor.u32 %s43, %s44
      %p46 = scmp.eq.s32.totalorder %s45, 0
      %s48 = sadd.s32 %s47, 1
      %s49 = scalar_select %p46, %s47, %s48
      %p52 = pneg %p46
      %p53 = scmp.eq.s32.totalorder %s14, 1
      %p54 = por %p52, %p53
      %p55 = scmp.ne.s32.totalorder %s47, %s50
      %p56 = scmp.eq.s32.totalorder %s14, 0
      %p57 = por %p55, %p56
      %p58 = scmp.ne.s32.totalorder %s47, %s50
      %p59 = scmp.eq.s32.totalorder %s19, 1
      %p60 = por %p58, %p59
      %p61 = scmp.ne.s32.totalorder %s50, %s51
      %p62 = scmp.eq.s32.totalorder %s19, 0
      %p63 = por %p61, %p62
      %p64 = scmp.ne.s32.totalorder %s50, %s51
      %p65 = scmp.eq.s32.totalorder %s20, 1
      %p66 = por %p64, %p65
      %p68 = scmp.ne.s32.totalorder %s51, %s67
      %p69 = scmp.eq.s32.totalorder %s20, 0
      %p70 = por %p68, %p69
      %s71 = sadd.s32 %s22, %s23
      %s72 = sadd.s32 %s36, %s32
      %s73 = ssub.s32 %s21, %s40
      %s74 = ssub.s32 %s71, %s72
      %s75 = sor.u32 %s73, %s74
      %p76 = scmp.eq.s32.totalorder %s75, 0
      %s78 = sadd.s32 %s77, 1
      %s79 = scalar_select %p76, %s77, %s78
      %p82 = pneg %p76
      %p83 = scmp.eq.s32.totalorder %s14, 1
      %p84 = por %p82, %p83
      %p85 = scmp.ne.s32.totalorder %s77, %s80
      %p86 = scmp.eq.s32.totalorder %s14, 0
      %p87 = por %p85, %p86
      %p88 = scmp.ne.s32.totalorder %s77, %s80
      %p89 = scmp.eq.s32.totalorder %s19, 1
      %p90 = por %p88, %p89
      %p91 = scmp.ne.s32.totalorder %s80, %s81
      %p92 = scmp.eq.s32.totalorder %s19, 0
      %p93 = por %p91, %p92
      %p94 = scmp.ne.s32.totalorder %s80, %s81
      %p95 = scmp.eq.s32.totalorder %s20, 1
      %p96 = por %p94, %p95
      %p98 = scmp.ne.s32.totalorder %s81, %s97
      %p99 = scmp.eq.s32.totalorder %s20, 0
      %p100 = por %p98, %p99
      %s101 = ssub.s32 %s21, %s40
      %s102 = ssub.s32 %s22, %s36
      %s103 = sor.u32 %s101, %s102
      %p104 = scmp.eq.s32.totalorder %s103, 0
      %s106 = sadd.s32 %s105, 1
      %s107 = scalar_select %p104, %s105, %s106
      %p110 = pneg %p104
      %p111 = scmp.eq.s32.totalorder %s14, 1
      %p112 = por %p110, %p111
      %p113 = scmp.ne.s32.totalorder %s105, %s108
      %p114 = scmp.eq.s32.totalorder %s14, 0
      %p115 = por %p113, %p114
      %p116 = scmp.ne.s32.totalorder %s105, %s108
      %p117 = scmp.eq.s32.totalorder %s19, 1
      %p118 = por %p116, %p117
      %p119 = scmp.ne.s32.totalorder %s108, %s109
      %p120 = scmp.eq.s32.totalorder %s19, 0
      %p121 = por %p119, %p120
      %p122 = scmp.ne.s32.totalorder %s108, %s109
      %p123 = scmp.eq.s32.totalorder %s20, 1
      %p124 = por %p122, %p123
      %p126 = scmp.ne.s32.totalorder %s109, %s125
      %p127 = scmp.eq.s32.totalorder %s20, 0
      %p128 = por %p126, %p127
      %p129 = scmp.le.s32.totalorder 1, %s14
      %p130 = scmp.lt.s32.totalorder %s14, 3
      %p131 = pnand %p129, %p130
      %p132 = pneg %p131
      // Predicated region
      $region9: #{tpu_custom_call.1} parent=5 // pred_check
        _
      $region10: #{tpu_custom_call.1} parent=5 // pred_check_branch
        %134 = sbr.rel (%p131) target = $region12
      $region11: #{tpu_custom_call.1} parent=5 // pred_region
        %s135 = ssub.s32 %s14, 1
      $region12: #{tpu_custom_call.1} parent=5 // pred_fallthru
        _
      %p136 = scmp.lt.s32.totalorder %s14, 2
      // Predicated region
      $region13: #{tpu_custom_call.1} parent=5 // pred_check
        %p137 = pneg %p136
      $region14: #{tpu_custom_call.1} parent=5 // pred_check_branch
        %139 = sbr.rel (%p137) target = $region16
      $region15: #{tpu_custom_call.1} parent=5 // pred_region
        // Predicated region
        $region17: #{tpu_custom_call.1} parent=15 // pred_check
          %p140 = pneg %p57
        $region18: #{tpu_custom_call.1} parent=15 // pred_check_branch
          %142 = sbr.rel (%p140) target = $region20
        $region19: #{tpu_custom_call.1} parent=15 // pred_region
          %s143 = sand.u32 %s47, 1
          %s144 = scalar_lea.sflag [#allocation6], %s143
          %s145 = sand.u32 %s47, 1
          %s146 = smul.addr %s145, 8
          %s147 = scalar_lea.vmem [#allocation5], %s146
          %s148 = sadd.s32 %s22, %s23
          %s150 = ssub.s32 128, 128
          %151 = vsyncadd %s144, %s150
          %s152 = sadd.s32 %s148, %s21
          %s153 = smul.addr %s152, 128
          %s154 = scalar_lea.hbm %s0, %s153
          %s156 = sshll.u32 %s147, 4
          %s157 = int_to_ptr.vmem [resolvable:$true] %s156
          %159 = dma.hbm_to_vmem [thread:$0]  %s154, 128, %s157, %s144
        $region20: #{tpu_custom_call.1} parent=15 // pred_fallthru
          _
        // Predicated region
        $region21: #{tpu_custom_call.1} parent=15 // pred_check
          %p160 = pneg %p87
        $region22: #{tpu_custom_call.1} parent=15 // pred_check_branch
          %162 = sbr.rel (%p160) target = $region24
        $region23: #{tpu_custom_call.1} parent=15 // pred_region
          %s163 = sand.u32 %s77, 1
          %s164 = scalar_lea.sflag [#allocation8], %s163
          %s165 = sand.u32 %s77, 1
          %s166 = smul.addr %s165, 8
          %s167 = scalar_lea.vmem [#allocation7], %s166
          %s168 = sadd.s32 %s22, %s23
          %s170 = ssub.s32 128, 128
          %171 = vsyncadd %s164, %s170
          %s172 = sadd.s32 %s168, %s21
          %s173 = smul.addr %s172, 128
          %s174 = scalar_lea.hbm %s1, %s173
          %s176 = sshll.u32 %s167, 4
          %s177 = int_to_ptr.vmem [resolvable:$true] %s176
          %179 = dma.hbm_to_vmem [thread:$0]  %s174, 128, %s177, %s164
        $region24: #{tpu_custom_call.1} parent=15 // pred_fallthru
          _
      $region16: #{tpu_custom_call.1} parent=5 // pred_fallthru
        _
      %p180 = scmp.le.s32.totalorder 1, %s14
      %p181 = scmp.lt.s32.totalorder %s14, 3
      %p182 = pnand %p180, %p181
      %p183 = pneg %p182
      // Predicated region
      $region25: #{tpu_custom_call.1} parent=5 // pred_check
        _
      $region26: #{tpu_custom_call.1} parent=5 // pred_check_branch
        %185 = sbr.rel (%p182) target = $region28
      $region27: #{tpu_custom_call.1} parent=5 // pred_region
        %s186 = ssub.s32 %s14, 1
        %s187 = sand.u32 %s50, 1
        %s188 = scalar_lea.sflag [#allocation6], %s187
        %s189 = sand.u32 %s50, 1
        %s190 = smul.addr %s189, 8
        %s191 = scalar_lea.vmem [#allocation5], %s190
        // Predicated region
        $region29: #{tpu_custom_call.1} parent=27 // pred_check
          %p192 = pneg %p63
        $region30: #{tpu_custom_call.1} parent=27 // pred_check_branch
          %194 = sbr.rel (%p192) target = $region32
        $region31: #{tpu_custom_call.1} parent=27 // pred_region
          %195 = dma.done %s188, 128
        $region32: #{tpu_custom_call.1} parent=27 // pred_fallthru
          _
        %s196 = sand.u32 %s80, 1
        %s197 = scalar_lea.sflag [#allocation8], %s196
        %s198 = sand.u32 %s80, 1
        %s199 = smul.addr %s198, 8
        %s200 = scalar_lea.vmem [#allocation7], %s199
        // Predicated region
        $region33: #{tpu_custom_call.1} parent=27 // pred_check
          %p201 = pneg %p93
        $region34: #{tpu_custom_call.1} parent=27 // pred_check_branch
          %203 = sbr.rel (%p201) target = $region36
        $region35: #{tpu_custom_call.1} parent=27 // pred_region
          %204 = dma.done %s197, 128
        $region36: #{tpu_custom_call.1} parent=27 // pred_fallthru
          _
        %s205 = sand.u32 %s50, 1
        %s206 = scalar_lea.sflag [#allocation6], %s205
        %s207 = sand.u32 %s50, 1
        %s208 = smul.addr %s207, 8
        %s209 = scalar_lea.vmem [#allocation5], %s208
        %p210 = pneg %p63
        %p211 = pneg %p60
        %s212 = sand.u32 %s80, 1
        %s213 = scalar_lea.sflag [#allocation8], %s212
        %s214 = sand.u32 %s80, 1
        %s215 = smul.addr %s214, 8
        %s216 = scalar_lea.vmem [#allocation7], %s215
        %p217 = pneg %p93
        %p218 = pneg %p90
        %p219 = pneg %p121
        %p220 = pneg %p118
        %p221 = scmp.lt.s32.totalorder %s24, 1
        %s222 = scalar_select %p221, %s24, 1
        %p223 = scmp.lt.s32.totalorder %s25, 0
        %s224 = scalar_select %p223, %s25, 0
        %s225 = sadd.s32 %s224, %s222
        %s226 = smul.addr %s225, 4
        %s227 = scalar_lea.vmem %s2, %s226
        %s228 = sadd.s32 %s25, %s26
        %s229 = sadd.s32 %s25, %s26
        %p230 = scmp.lt.s32.totalorder %s24, 1
        %s231 = scalar_select %p230, %s24, 1
        %p232 = scmp.lt.s32.totalorder %s25, 0
        %s233 = scalar_select %p232, %s25, 0
        %s234 = sadd.s32 %s233, %s231
        %s235 = smul.addr %s234, 4
        %s236 = scalar_lea.vmem %s2, %s235
        %p237 = scmp.eq.s32.totalorder %s26, 0
        // Predicated region
        $region37: #{tpu_custom_call.1} parent=27 // pred_check
          %p238 = pneg %p237
        $region38: #{tpu_custom_call.1} parent=27 // pred_check_branch
          %240 = sbr.rel (%p238) target = $region40
        $region39: #{tpu_custom_call.1} parent=27 // pred_region
          %241 = vst [vmem:[#allocation2] sm:$0xff] 0.0
          %242 = vst [vmem:[#allocation3] sm:$0xff] 0.0
          %243 = vst [vmem:[#allocation4] sm:$0xff] 0.0
        $region40: #{tpu_custom_call.1} parent=27 // pred_fallthru
          _
        %v244 = vld [vmem:[%s191] sm:$0xff]
        %v245 = vld [vmem:[%s200] sm:$0xff]
        %v246 = vmax.f32 %v245, 0.0
        %v247 = vmin.f32 %v246, 1.0
        %v248 = vmul.f32 %v247, 0.0
        %v249 = vadd.f32 %v248, 0.5
        %v250 = vmul.f32 %v249, %v244
        %v251 = vmul.f32 %v249, %v247
        %v252 = vld [vmem:[#allocation2] sm:$0xff]
        %v253 = vmul.f32 %v250, %v251
        %v254 = vadd.f32 %v252, %v253
        %255 = vst [vmem:[#allocation2] sm:$0xff] %v254
        %v256 = vld [vmem:[#allocation3] sm:$0xff]
        %v257 = vmul.f32 %v250, %v250
        %v258 = vadd.f32 %v256, %v257
        %259 = vst [vmem:[#allocation3] sm:$0xff] %v258
        %v260 = vld [vmem:[#allocation4] sm:$0xff]
        %v261 = vmul.f32 %v251, %v251
        %v262 = vadd.f32 %v260, %v261
        %263 = vst [vmem:[#allocation4] sm:$0xff] %v262
        // Predicated region
        $region41: #{tpu_custom_call.1} parent=27 // pred_check
          %p264 = pneg %p237
        $region42: #{tpu_custom_call.1} parent=27 // pred_check_branch
          %266 = sbr.rel (%p264) target = $region44
        $region43: #{tpu_custom_call.1} parent=27 // pred_region
          %v267 = vld [vmem:[#allocation2] sm:$0xff]
          %v268 = vrot.slane %v267, 4
          %v269 = vadd.f32 %v267, %v268
          %v270 = vrot.slane %v269, 2
          %v271 = vadd.f32 %v269, %v270
          %v272 = vrot.slane %v271, 1
          %v273 = vadd.f32 %v271, %v272
          %274 = vst [vmem:[%s236] sm:$0x1] %v273
          %v275 = vld [vmem:[#allocation3] sm:$0xff]
          %v276 = vrot.slane %v275, 4
          %v277 = vadd.f32 %v275, %v276
          %v278 = vrot.slane %v277, 2
          %v279 = vadd.f32 %v277, %v278
          %v280 = vrot.slane %v279, 1
          %v281 = vadd.f32 %v279, %v280
          %282 = vst [vmem:[%s236 + $0x1] sm:$0x1] %v281
          %v283 = vld [vmem:[#allocation4] sm:$0xff]
          %v284 = vrot.slane %v283, 4
          %v285 = vadd.f32 %v283, %v284
          %v286 = vrot.slane %v285, 2
          %v287 = vadd.f32 %v285, %v286
          %v288 = vrot.slane %v287, 1
          %v289 = vadd.f32 %v287, %v288
          %290 = vst [vmem:[%s236 + $0x2] sm:$0x1] %v289
        $region44: #{tpu_custom_call.1} parent=27 // pred_fallthru
          _
        %p291 = scmp.lt.s32.totalorder %s24, 1
        %s292 = scalar_select %p291, %s24, 1
        %p293 = scmp.lt.s32.totalorder %s25, 0
        %s294 = scalar_select %p293, %s25, 0
        %s295 = sadd.s32 %s294, %s292
        %s296 = smul.addr %s295, 4
        %s297 = scalar_lea.vmem %s2, %s296
        // Predicated region
        $region45: #{tpu_custom_call.1} parent=27 // pred_check
          %p298 = pneg %p118
        $region46: #{tpu_custom_call.1} parent=27 // pred_check_branch
          %300 = sbr.rel (%p298) target = $region48
        $region47: #{tpu_custom_call.1} parent=27 // pred_region
          _
        $region48: #{tpu_custom_call.1} parent=27 // pred_fallthru
          _
      $region28: #{tpu_custom_call.1} parent=5 // pred_fallthru
        _
      %p301 = scmp.le.s32.totalorder 2, %s14
      // Predicated region
      $region49: #{tpu_custom_call.1} parent=5 // pred_check
        %p302 = pneg %p301
      $region50: #{tpu_custom_call.1} parent=5 // pred_check_branch
        %304 = sbr.rel (%p302) target = $region52
      $region51: #{tpu_custom_call.1} parent=5 // pred_region
        %s305 = ssub.s32 %s14, 2
        // Predicated region
        $region53: #{tpu_custom_call.1} parent=51 // pred_check
          %p306 = pneg %p124
        $region54: #{tpu_custom_call.1} parent=51 // pred_check_branch
          %308 = sbr.rel (%p306) target = $region56
        $region55: #{tpu_custom_call.1} parent=51 // pred_region
          %p309 = scmp.lt.s32.totalorder %s27, 1
          %s310 = scalar_select %p309, %s27, 1
          %p311 = scmp.lt.s32.totalorder %s28, 0
          %s312 = scalar_select %p311, %s28, 0
          %s313 = sadd.s32 %s312, %s310
          %s314 = smul.addr %s313, 4
          %s315 = scalar_lea.vmem %s2, %s314
        $region56: #{tpu_custom_call.1} parent=51 // pred_fallthru
          _
      $region52: #{tpu_custom_call.1} parent=5 // pred_fallthru
        _
    $region6: #{tpu_custom_call.1} parent=1 // loop_footer
      %s18 = sadd.s32 1, %s14
    $region7: #{tpu_custom_call.1} parent=1 // loop_footer_branch
      %13 = sbr.rel target = $region3
    $region8: #{tpu_custom_call.1} parent=1 // loop_exit
      _
    %316 = vsyncpa [#allocation6], 1
    %s317 = scalar_lea.sflag [#allocation6], 1
    %318 = vsyncpa %s317, 1
    %319 = vsyncpa [#allocation8], 1
    %s320 = scalar_lea.sflag [#allocation8], 1
    %321 = vsyncpa %s320, 1

</llo_original>
